<compile_context>
chip_gen: v5e
topology: v5e:2x2
jax: 0.10.0
libtpu: 0.0.40
codegen_flags: <defaults>
</compile_context>

<pallas_src>
import jax
import jax.numpy as jnp
from jax import lax
from jax.experimental import pallas as pl
from jax.experimental.pallas import tpu as pltpu


def _round_up(x, m):
    return ((x + m - 1) // m) * m


def _linear_kernel_f32(x_ref, w_ref, b_ref, o_ref):
    # f32-output fast path: o_ref's index map ignores k, so the tile is
    # resident in VMEM across the reduction -> accumulate directly into it.
    k = pl.program_id(2)

    @pl.when(k == 0)
    def _():
        o_ref[...] = jnp.zeros_like(o_ref)

    o_ref[...] += lax.dot_general(
        x_ref[...], w_ref[...],
        dimension_numbers=(((1,), (1,)), ((), ())),   # x:(tm,tk) . W:(tn,tk)^T
        preferred_element_type=jnp.float32,
    )

    @pl.when(k == pl.num_programs(2) - 1)
    def _():
        o_ref[...] += b_ref[...]


def _linear_kernel_acc(x_ref, w_ref, b_ref, o_ref, acc_ref):
    # General path (output dtype narrower than f32): f32 scratch accumulator,
    # bias add in f32, single cast+store on the last K step.
    k = pl.program_id(2)

    @pl.when(k == 0)
    def _():
        acc_ref[...] = jnp.zeros_like(acc_ref)

    acc_ref[...] += lax.dot_general(
        x_ref[...], w_ref[...],
        dimension_numbers=(((1,), (1,)), ((), ())),
        preferred_element_type=jnp.float32,
    )

    @pl.when(k == pl.num_programs(2) - 1)
    def _():
        o_ref[...] = (acc_ref[...] + b_ref[...]).astype(o_ref.dtype)


def _choose_tiles(B, out_dim, in_dim):
    """Hardware-aligned tile sizes per the perf review."""
    m8 = _round_up(B, 8)            # f32 sublane granularity
    n128 = _round_up(out_dim, 128)  # lane-dense output
    k128 = _round_up(in_dim, 128)   # lane axis of x and W

    # Small-batch special case: one M block -> weight streamed exactly once.
    tm = m8 if m8 <= 512 else 512
    tn = min(n128, 512)
    tk = min(k128, 2048)

    # If M collapsed to a single block, split N (when possible) so v7x's
    # second TensorCore has a parallel block to work on.  x is tiny in this
    # regime, so re-streaming it across more N blocks is essentially free.
    if tm == m8 and m8 <= 512 and n128 >= 256:
        tn = min(tn, max(128, (n128 // 2) // 128 * 128))

    return tm, tn, tk


def fc_forward(x, weight, bias):
    """x: (B, in_dim), weight: (out_dim, in_dim), bias: (out_dim,)."""
    B, in_dim = x.shape
    out_dim = weight.shape[0]
    assert weight.shape == (out_dim, in_dim)
    assert bias.shape == (out_dim,)

    tm, tn, tk = _choose_tiles(B, out_dim, in_dim)

    pad_m = _round_up(B, tm)
    pad_n = _round_up(out_dim, tn)
    pad_k = _round_up(in_dim, tk)

    # Pad only when actually needed (aligned shapes skip the extra HBM pass).
    x_p = x if (pad_m == B and pad_k == in_dim) else jnp.pad(
        x, ((0, pad_m - B), (0, pad_k - in_dim)))
    w_p = weight if (pad_n == out_dim and pad_k == in_dim) else jnp.pad(
        weight, ((0, pad_n - out_dim), (0, pad_k - in_dim)))
    b_p = (bias if pad_n == out_dim else jnp.pad(
        bias, (0, pad_n - out_dim))).reshape(1, pad_n)

    grid = (pad_m // tm, pad_n // tn, pad_k // tk)

    # f32 output -> accumulate directly into the resident output tile.
    if x.dtype == jnp.float32:
        kernel = _linear_kernel_f32
        scratch_shapes = []
    else:
        kernel = _linear_kernel_acc
        scratch_shapes = [pltpu.VMEM((tm, tn), jnp.float32)]

    itemsize = jnp.dtype(x.dtype).itemsize
    cost = pl.CostEstimate(
        flops=2 * pad_m * pad_n * pad_k,
        transcendentals=0,
        bytes_accessed=(x_p.size * itemsize
                        + w_p.size * itemsize * (pad_m // tm)
                        + pad_m * pad_n * itemsize),
    )

    out_padded = pl.pallas_call(
        kernel,
        out_shape=jax.ShapeDtypeStruct((pad_m, pad_n), x.dtype),
        grid_spec=pltpu.PrefetchScalarGridSpec(
            num_scalar_prefetch=0,
            grid=grid,
            in_specs=[
                pl.BlockSpec((tm, tk), lambda i, j, k: (i, k)),   # x
                pl.BlockSpec((tn, tk), lambda i, j, k: (j, k)),   # W (out,in)
                pl.BlockSpec((1, tn), lambda i, j, k: (0, j)),    # bias
            ],
            out_specs=pl.BlockSpec((tm, tn), lambda i, j, k: (i, j)),
            scratch_shapes=scratch_shapes,
        ),
        compiler_params=pltpu.CompilerParams(
            dimension_semantics=("parallel", "parallel", "arbitrary"),
            vmem_limit_bytes=48 * 1024 * 1024,   # safe on v7x (64 MiB phys),
                                                 # a lift over v5e/v6e defaults
        ),
        cost_estimate=cost,
    )(x_p, w_p, b_p)

    if pad_m == B and pad_n == out_dim:
        return out_padded
    return out_padded[:B, :out_dim]


if __name__ == "__main__":
    in_dim, out_dim = 500, 10
    batch = 2

    key = jax.random.PRNGKey(0)
    kx, kw, kb = jax.random.split(key, 3)

    # Deterministic parameter init mirroring nn.Linear's default:
    # uniform(-1/sqrt(in_dim), +1/sqrt(in_dim)) for both weight and bias.
    bound = 1.0 / jnp.sqrt(jnp.float32(in_dim))
    weight = jax.random.uniform(kw, (out_dim, in_dim), jnp.float32,
                                minval=-bound, maxval=bound)
    bias = jax.random.uniform(kb, (out_dim,), jnp.float32,
                              minval=-bound, maxval=bound)

    x = jax.random.normal(kx, (batch, in_dim), jnp.float32)

    out = fc_forward(x, weight, bias)
    out = jax.block_until_ready(out)

    # Reference check against plain JAX (same math as torch.nn.Linear).
    ref = x @ weight.T + bias
    assert out.shape == (batch, out_dim)
    assert jnp.allclose(out, ref, atol=1e-5, rtol=1e-5)

    print("KERNEL_OK")
</pallas_src>

<mosaic_0001>
module attributes {stable_mosaic.version = 11 : i64} {
  func.func @_linear_kernel_f32(%arg0: i32, %arg1: i32, %arg2: i32, %arg3: memref<8x512xf32, #tpu.memory_space<vmem>>, %arg4: memref<128x512xf32, #tpu.memory_space<vmem>>, %arg5: memref<1x128xf32, #tpu.memory_space<vmem>>, %arg6: memref<8x128xf32, #tpu.memory_space<vmem>>) attributes {dimension_semantics = [#tpu.dimension_semantics<parallel>, #tpu.dimension_semantics<parallel>, #tpu.dimension_semantics<arbitrary>], iteration_bounds = array<i64: 1, 1, 1>, scalar_prefetch = 0 : i64, scratch_operands = 0 : i64, tpu.core_type = #tpu.core_type<tc>, window_params = [{transform_indices = @transform_0, window_bounds = array<i64: 8, 512>}, {transform_indices = @transform_1, window_bounds = array<i64: 128, 512>}, {transform_indices = @transform_2, window_bounds = array<i64: 1, 128>}, {transform_indices = @transform_3, window_bounds = array<i64: 8, 128>}]} {
    %c0_i32 = arith.constant 0 : i32
    %0 = arith.cmpi eq, %arg2, %c0_i32 : i32
    %1 = arith.extui %0 : i1 to i32
    %c0_i32_0 = arith.constant 0 : i32
    %2 = arith.cmpi ne, %1, %c0_i32_0 : i32
    scf.if %2 {
      %cst_10 = arith.constant 0.000000e+00 : f32
      %12 = vector.broadcast %cst_10 : f32 to vector<8x128xf32>
      %c0_11 = arith.constant 0 : index
      %c0_12 = arith.constant 0 : index
      %13 = vector.load %arg6[%c0_11, %c0_12] : memref<8x128xf32, #tpu.memory_space<vmem>>, vector<8x128xf32>
      tpu.vector_store %arg6[%c0_11, %c0_12], %12 {strides = array<i32>} : memref<8x128xf32, #tpu.memory_space<vmem>>, vector<8x128xf32>,
    } else {
    }
    %c0 = arith.constant 0 : index
    %c0_1 = arith.constant 0 : index
    %3 = vector.load %arg6[%c0, %c0_1] : memref<8x128xf32, #tpu.memory_space<vmem>>, vector<8x128xf32>
    %c0_2 = arith.constant 0 : index
    %c0_3 = arith.constant 0 : index
    %4 = vector.load %arg3[%c0_2, %c0_3] : memref<8x512xf32, #tpu.memory_space<vmem>>, vector<8x512xf32>
    %c0_4 = arith.constant 0 : index
    %c0_5 = arith.constant 0 : index
    %5 = vector.load %arg4[%c0_4, %c0_5] : memref<128x512xf32, #tpu.memory_space<vmem>>, vector<128x512xf32>
    %cst = arith.constant dense<0.000000e+00> : vector<8x128xf32>
    %6 = tpu.matmul %4, %5, %cst {dimension_numbers = #tpu.dot_dimension_numbers<[1], [1], [0], [0], [0, 0, 1, 0], [], []>} : vector<8x512xf32>, vector<128x512xf32>, vector<8x128xf32> -> vector<8x128xf32>
    %7 = arith.addf %3, %6 : vector<8x128xf32>
    %c0_6 = arith.constant 0 : index
    %c0_7 = arith.constant 0 : index
    %8 = vector.load %arg6[%c0_6, %c0_7] : memref<8x128xf32, #tpu.memory_space<vmem>>, vector<8x128xf32>
    tpu.vector_store %arg6[%c0_6, %c0_7], %7 {strides = array<i32>} : memref<8x128xf32, #tpu.memory_space<vmem>>, vector<8x128xf32>,
    %c0_i32_8 = arith.constant 0 : i32
    %9 = arith.cmpi eq, %arg2, %c0_i32_8 : i32
    %10 = arith.extui %9 : i1 to i32
    %c0_i32_9 = arith.constant 0 : i32
    %11 = arith.cmpi ne, %10, %c0_i32_9 : i32
    scf.if %11 {
      %c0_10 = arith.constant 0 : index
      %c0_11 = arith.constant 0 : index
      %12 = vector.load %arg6[%c0_10, %c0_11] : memref<8x128xf32, #tpu.memory_space<vmem>>, vector<8x128xf32>
      %c0_12 = arith.constant 0 : index
      %c0_13 = arith.constant 0 : index
      %13 = vector.load %arg5[%c0_12, %c0_13] : memref<1x128xf32, #tpu.memory_space<vmem>>, vector<1x128xf32>
      %14 = vector.broadcast %13 : vector<1x128xf32> to vector<8x128xf32>
      %15 = arith.addf %12, %14 : vector<8x128xf32>
      %c0_14 = arith.constant 0 : index
      %c0_15 = arith.constant 0 : index
      %16 = vector.load %arg6[%c0_14, %c0_15] : memref<8x128xf32, #tpu.memory_space<vmem>>, vector<8x128xf32>
      tpu.vector_store %arg6[%c0_14, %c0_15], %15 {strides = array<i32>} : memref<8x128xf32, #tpu.memory_space<vmem>>, vector<8x128xf32>,
    } else {
    }
    return
  }
  func.func @transform_0(%arg0: i32, %arg1: i32, %arg2: i32) -> (i32, i32) {
    %c0_i32 = arith.constant 0 : i32
    return %arg0, %arg2 : i32, i32
  }
  func.func @transform_1(%arg0: i32, %arg1: i32, %arg2: i32) -> (i32, i32) {
    %c0_i32 = arith.constant 0 : i32
    return %arg1, %arg2 : i32, i32
  }
  func.func @transform_2(%arg0: i32, %arg1: i32, %arg2: i32) -> (i32, i32) {
    %c0_i32 = arith.constant 0 : i32
    %c0_i32_0 = arith.constant 0 : i32
    return %c0_i32, %arg1 : i32, i32
  }
  func.func @transform_3(%arg0: i32, %arg1: i32, %arg2: i32) -> (i32, i32) {
    %c0_i32 = arith.constant 0 : i32
    return %arg0, %arg1 : i32, i32
  }
}

</mosaic_0001>

<llo_original>
// kernel: tpu_custom_call.1
$region0: #{tpu_custom_call.1}
  #allocation0 [shape = 'u32[]', space=smem, size = 0x4, offset = 0x4, fixed_abs, tag = 'smem constant byte address 0x4 - core index']
  #allocation1 [shape = 'u32[72,128]{1,0:T(1,128)}', space=vmem, size = 0x9000, scoped, tag = 'internal scratch']
  %s0 = inlined_call_operand.hbm [shape: f32[8,512], index: 0, kind: input, shape index: {}]
  %s1 = inlined_call_operand.hbm [shape: f32[128,512], index: 1, kind: input, shape index: {}]
  %s2 = inlined_call_operand.vmem [shape: f32[1,128], index: 2, kind: input, shape index: {}]
  %s3 = inlined_call_operand.hbm [shape: f32[8,128], index: 3, kind: output, shape index: {}]
  %s4 = sld [smem:[#allocation0]]
  $region38: #{tpu_custom_call.1} parent=0
    _
  %s6 = ssub.s32 1, %s4
  %s7 = scalar_select 0, %s6, %s4
  $region1: #{tpu_custom_call.1} parent=0
    #allocation2 [shape = 'u8[16384]{0}', space=vmem, size = 0x4000, scoped, tag = 'input window, operand 0, single buffered']
    #allocation3 [shape = 's32[1]{0}', space=sflag, size = 0x4, scoped, tag = 'scoped memory for tpu_custom_call.1']
    #allocation4 [shape = 's32[1]{0}', space=sflag, size = 0x4, scoped, tag = 'scoped memory for tpu_custom_call.1']
    #allocation5 [shape = 'u8[262144]{0}', space=vmem, size = 0x40000, scoped, tag = 'input window, operand 1, single buffered']
    #allocation6 [shape = 's32[1]{0}', space=sflag, size = 0x4, scoped, tag = 'scoped memory for tpu_custom_call.1']
    #allocation7 [shape = 'u8[4096]{0}', space=vmem, size = 0x1000, scoped, tag = 'output window, operand 0, single buffered']
    %8 = vsyncpa [#allocation3], 0
    %9 = vsyncpa [#allocation6], 0
    %10 = vsyncpa [#allocation4], 0
    // Predicated region
    $region2: #{tpu_custom_call.1} parent=1 // pred_check
      _
    $region3: #{tpu_custom_call.1} parent=1 // pred_check_branch
      %12 = sbr.rel (0) target = $region5
    $region4: #{tpu_custom_call.1} parent=1 // pred_region
      %14 = vsyncadd [#allocation3], 0
      %s16 = sshll.u32 %s0, 4
      %s17 = int_to_ptr.hbm [resolvable:$true] %s16
      %s18 = sshll.u32 [#allocation2], 4
      %s19 = int_to_ptr.vmem [resolvable:$true] %s18
      %21 = dma.hbm_to_vmem [thread:$0]  %s17, 512, %s19, [#allocation3]
    $region5: #{tpu_custom_call.1} parent=1 // pred_fallthru
      _
    // Predicated region
    $region6: #{tpu_custom_call.1} parent=1 // pred_check
      _
    $region7: #{tpu_custom_call.1} parent=1 // pred_check_branch
      %23 = sbr.rel (0) target = $region9
    $region8: #{tpu_custom_call.1} parent=1 // pred_region
      %25 = vsyncadd [#allocation6], 0
      %s26 = sshll.u32 %s1, 4
      %s27 = int_to_ptr.hbm [resolvable:$true] %s26
      %s28 = sshll.u32 [#allocation5], 4
      %s29 = int_to_ptr.vmem [resolvable:$true] %s28
      %34 = dma.hbm_to_vmem [thread:$0]  %s27, 8192, %s29, [#allocation6], 512, 512, 32
    $region9: #{tpu_custom_call.1} parent=1 // pred_fallthru
      _
    // Predicated region
    $region10: #{tpu_custom_call.1} parent=1 // pred_check
      _
    $region11: #{tpu_custom_call.1} parent=1 // pred_check_branch
      %36 = sbr.rel (0) target = $region13
    $region12: #{tpu_custom_call.1} parent=1 // pred_region
      _
    $region13: #{tpu_custom_call.1} parent=1 // pred_fallthru
      _
    // Predicated region
    $region14: #{tpu_custom_call.1} parent=1 // pred_check
      _
    $region15: #{tpu_custom_call.1} parent=1 // pred_check_branch
      %38 = sbr.rel (0) target = $region17
    $region16: #{tpu_custom_call.1} parent=1 // pred_region
      %40 = dma.done [#allocation3], 512
    $region17: #{tpu_custom_call.1} parent=1 // pred_fallthru
      _
    // Predicated region
    $region18: #{tpu_custom_call.1} parent=1 // pred_check
      _
    $region19: #{tpu_custom_call.1} parent=1 // pred_check_branch
      %42 = sbr.rel (0) target = $region21
    $region20: #{tpu_custom_call.1} parent=1 // pred_region
      %44 = dma.done [#allocation6], 8192
    $region21: #{tpu_custom_call.1} parent=1 // pred_fallthru
      _
    %p45 = scmp.eq.s32.totalorder 0, 0
    // Predicated region
    $region22: #{tpu_custom_call.1} parent=1 // pred_check
      %p46 = pneg %p45
    $region23: #{tpu_custom_call.1} parent=1 // pred_check_branch
      %48 = sbr.rel (%p46) target = $region25
    $region24: #{tpu_custom_call.1} parent=1 // pred_region
      %49 = vst [vmem:[#allocation7] sm:$0xff] 0.0
    $region25: #{tpu_custom_call.1} parent=1 // pred_fallthru
      _
    %v50 = vld [vmem:[#allocation7] sm:$0xff]
    %v51 = vld [vmem:[#allocation2] sm:$0xff]
    %v52 = vld [vmem:[#allocation2 + $0x8] sm:$0xff]
    %v53 = vld [vmem:[#allocation2 + $0x10] sm:$0xff]
    %v54 = vld [vmem:[#allocation2 + $0x18] sm:$0xff]
    %v55 = vld [vmem:[#allocation5] sm:$0xff]
    %v56 = vld [vmem:[#allocation5 + $0x8] sm:$0xff]
    %v57 = vld [vmem:[#allocation5 + $0x10] sm:$0xff]
    %v58 = vld [vmem:[#allocation5 + $0x18] sm:$0xff]
    %v59 = vld [vmem:[#allocation5 + $0x20] sm:$0xff]
    %v60 = vld [vmem:[#allocation5 + $0x28] sm:$0xff]
    %v61 = vld [vmem:[#allocation5 + $0x30] sm:$0xff]
    %v62 = vld [vmem:[#allocation5 + $0x38] sm:$0xff]
    %v63 = vld [vmem:[#allocation5 + $0x40] sm:$0xff]
    %v64 = vld [vmem:[#allocation5 + $0x48] sm:$0xff]
    %v65 = vld [vmem:[#allocation5 + $0x50] sm:$0xff]
    %v66 = vld [vmem:[#allocation5 + $0x58] sm:$0xff]
    %v67 = vld [vmem:[#allocation5 + $0x60] sm:$0xff]
    %v68 = vld [vmem:[#allocation5 + $0x68] sm:$0xff]
    %v69 = vld [vmem:[#allocation5 + $0x70] sm:$0xff]
    %v70 = vld [vmem:[#allocation5 + $0x78] sm:$0xff]
    %v71 = vld [vmem:[#allocation5 + $0x80] sm:$0xff]
    %v72 = vld [vmem:[#allocation5 + $0x88] sm:$0xff]
    %v73 = vld [vmem:[#allocation5 + $0x90] sm:$0xff]
    %v74 = vld [vmem:[#allocation5 + $0x98] sm:$0xff]
    %v75 = vld [vmem:[#allocation5 + $0xa0] sm:$0xff]
    %v76 = vld [vmem:[#allocation5 + $0xa8] sm:$0xff]
    %v77 = vld [vmem:[#allocation5 + $0xb0] sm:$0xff]
    %v78 = vld [vmem:[#allocation5 + $0xb8] sm:$0xff]
    %v79 = vld [vmem:[#allocation5 + $0xc0] sm:$0xff]
    %v80 = vld [vmem:[#allocation5 + $0xc8] sm:$0xff]
    %v81 = vld [vmem:[#allocation5 + $0xd0] sm:$0xff]
    %v82 = vld [vmem:[#allocation5 + $0xd8] sm:$0xff]
    %v83 = vld [vmem:[#allocation5 + $0xe0] sm:$0xff]
    %v84 = vld [vmem:[#allocation5 + $0xe8] sm:$0xff]
    %v85 = vld [vmem:[#allocation5 + $0xf0] sm:$0xff]
    %v86 = vld [vmem:[#allocation5 + $0xf8] sm:$0xff]
    %v87 = vld [vmem:[#allocation5 + $0x100] sm:$0xff]
    %v88 = vld [vmem:[#allocation5 + $0x108] sm:$0xff]
    %v89 = vld [vmem:[#allocation5 + $0x110] sm:$0xff]
    %v90 = vld [vmem:[#allocation5 + $0x118] sm:$0xff]
    %v91 = vld [vmem:[#allocation5 + $0x120] sm:$0xff]
    %v92 = vld [vmem:[#allocation5 + $0x128] sm:$0xff]
    %v93 = vld [vmem:[#allocation5 + $0x130] sm:$0xff]
    %v94 = vld [vmem:[#allocation5 + $0x138] sm:$0xff]
    %v95 = vld [vmem:[#allocation5 + $0x140] sm:$0xff]
    %v96 = vld [vmem:[#allocation5 + $0x148] sm:$0xff]
    %v97 = vld [vmem:[#allocation5 + $0x150] sm:$0xff]
    %v98 = vld [vmem:[#allocation5 + $0x158] sm:$0xff]
    %v99 = vld [vmem:[#allocation5 + $0x160] sm:$0xff]
    %v100 = vld [vmem:[#allocation5 + $0x168] sm:$0xff]
    %v101 = vld [vmem:[#allocation5 + $0x170] sm:$0xff]
    %v102 = vld [vmem:[#allocation5 + $0x178] sm:$0xff]
    %v103 = vld [vmem:[#allocation5 + $0x180] sm:$0xff]
    %v104 = vld [vmem:[#allocation5 + $0x188] sm:$0xff]
    %v105 = vld [vmem:[#allocation5 + $0x190] sm:$0xff]
    %v106 = vld [vmem:[#allocation5 + $0x198] sm:$0xff]
    %v107 = vld [vmem:[#allocation5 + $0x1a0] sm:$0xff]
    %v108 = vld [vmem:[#allocation5 + $0x1a8] sm:$0xff]
    %v109 = vld [vmem:[#allocation5 + $0x1b0] sm:$0xff]
    %v110 = vld [vmem:[#allocation5 + $0x1b8] sm:$0xff]
    %v111 = vld [vmem:[#allocation5 + $0x1c0] sm:$0xff]
    %v112 = vld [vmem:[#allocation5 + $0x1c8] sm:$0xff]
    %v113 = vld [vmem:[#allocation5 + $0x1d0] sm:$0xff]
    %v114 = vld [vmem:[#allocation5 + $0x1d8] sm:$0xff]
    %v115 = vld [vmem:[#allocation5 + $0x1e0] sm:$0xff]
    %v116 = vld [vmem:[#allocation5 + $0x1e8] sm:$0xff]
    %v117 = vld [vmem:[#allocation5 + $0x1f0] sm:$0xff]
    %v118 = vld [vmem:[#allocation5 + $0x1f8] sm:$0xff]
    %119 = vmatpush.xpose.msra.mxu0 %v115
    %120 = vmatpush.xpose.msra.mxu0 %v111
    %121 = vmatpush.xpose.msra.mxu0 %v107
    %122 = vmatpush.xpose.msra.mxu0 %v103
    %123 = vmatpush.xpose.msra.mxu0 %v99
    %124 = vmatpush.xpose.msra.mxu0 %v95
    %125 = vmatpush.xpose.msra.mxu0 %v91
    %126 = vmatpush.xpose.msra.mxu0 %v87
    %127 = vmatpush.xpose.msra.mxu0 %v83
    %128 = vmatpush.xpose.msra.mxu0 %v79
    %129 = vmatpush.xpose.msra.mxu0 %v75
    %130 = vmatpush.xpose.msra.mxu0 %v71
    %131 = vmatpush.xpose.msra.mxu0 %v67
    %132 = vmatpush.xpose.msra.mxu0 %v63
    %133 = vmatpush.xpose.msra.mxu0 %v59
    %134 = vmatpush.xpose.msra.mxu0 %v55
    %135 = vmatmul.f32.gmra.mxu0 %v51
    %v136 = vpop.f32.mrf.mxu0
    %v137 = vadd.f32 0.0, %v136
    %138 = vdwg.mxu0
    %139 = vmatpush.xpose.msra.mxu0 %v116
    %140 = vmatpush.xpose.msra.mxu0 %v112
    %141 = vmatpush.xpose.msra.mxu0 %v108
    %142 = vmatpush.xpose.msra.mxu0 %v104
    %143 = vmatpush.xpose.msra.mxu0 %v100
    %144 = vmatpush.xpose.msra.mxu0 %v96
    %145 = vmatpush.xpose.msra.mxu0 %v92
    %146 = vmatpush.xpose.msra.mxu0 %v88
    %147 = vmatpush.xpose.msra.mxu0 %v84
    %148 = vmatpush.xpose.msra.mxu0 %v80
    %149 = vmatpush.xpose.msra.mxu0 %v76
    %150 = vmatpush.xpose.msra.mxu0 %v72
    %151 = vmatpush.xpose.msra.mxu0 %v68
    %152 = vmatpush.xpose.msra.mxu0 %v64
    %153 = vmatpush.xpose.msra.mxu0 %v60
    %154 = vmatpush.xpose.msra.mxu0 %v56
    %155 = vmatmul.f32.gmra.mxu0 %v52
    %v156 = vpop.f32.mrf.mxu0
    %v157 = vadd.f32 %v137, %v156
    %158 = vdwg.mxu0
    %159 = vmatpush.xpose.msra.mxu0 %v117
    %160 = vmatpush.xpose.msra.mxu0 %v113
    %161 = vmatpush.xpose.msra.mxu0 %v109
    %162 = vmatpush.xpose.msra.mxu0 %v105
    %163 = vmatpush.xpose.msra.mxu0 %v101
    %164 = vmatpush.xpose.msra.mxu0 %v97
    %165 = vmatpush.xpose.msra.mxu0 %v93
    %166 = vmatpush.xpose.msra.mxu0 %v89
    %167 = vmatpush.xpose.msra.mxu0 %v85
    %168 = vmatpush.xpose.msra.mxu0 %v81
    %169 = vmatpush.xpose.msra.mxu0 %v77
    %170 = vmatpush.xpose.msra.mxu0 %v73
    %171 = vmatpush.xpose.msra.mxu0 %v69
    %172 = vmatpush.xpose.msra.mxu0 %v65
    %173 = vmatpush.xpose.msra.mxu0 %v61
    %174 = vmatpush.xpose.msra.mxu0 %v57
    %175 = vmatmul.f32.gmra.mxu0 %v53
    %v176 = vpop.f32.mrf.mxu0
    %v177 = vadd.f32 %v157, %v176
    %178 = vdwg.mxu0
    %179 = vmatpush.xpose.msra.mxu0 %v118
    %180 = vmatpush.xpose.msra.mxu0 %v114
    %181 = vmatpush.xpose.msra.mxu0 %v110
    %182 = vmatpush.xpose.msra.mxu0 %v106
    %183 = vmatpush.xpose.msra.mxu0 %v102
    %184 = vmatpush.xpose.msra.mxu0 %v98
    %185 = vmatpush.xpose.msra.mxu0 %v94
    %186 = vmatpush.xpose.msra.mxu0 %v90
    %187 = vmatpush.xpose.msra.mxu0 %v86
    %188 = vmatpush.xpose.msra.mxu0 %v82
    %189 = vmatpush.xpose.msra.mxu0 %v78
    %190 = vmatpush.xpose.msra.mxu0 %v74
    %191 = vmatpush.xpose.msra.mxu0 %v70
    %192 = vmatpush.xpose.msra.mxu0 %v66
    %193 = vmatpush.xpose.msra.mxu0 %v62
    %194 = vmatpush.xpose.msra.mxu0 %v58
    %195 = vmatmul.f32.gmra.mxu0 %v54
    %v196 = vpop.f32.mrf.mxu0
    %v197 = vadd.f32 %v177, %v196
    %198 = vdwg.mxu0
    %v199 = vadd.f32 %v50, %v197
    %200 = vst [vmem:[#allocation7] sm:$0xff] %v199
    // Predicated region
    $region26: #{tpu_custom_call.1} parent=1 // pred_check
      %p201 = pneg %p45
    $region27: #{tpu_custom_call.1} parent=1 // pred_check_branch
      %203 = sbr.rel (%p201) target = $region29
    $region28: #{tpu_custom_call.1} parent=1 // pred_region
      %v204 = vld [vmem:[#allocation7] sm:$0xff]
      %v205 = vld [vmem:[%s2] sm:$0x1]
      %v207 = vperm.slane %v205, 0
      %v209 = vadd.f32 %v204, %v207
      %210 = vst [vmem:[#allocation7] sm:$0xff] %v209
    $region29: #{tpu_custom_call.1} parent=1 // pred_fallthru
      _
    // Predicated region
    $region30: #{tpu_custom_call.1} parent=1 // pred_check
      _
    $region31: #{tpu_custom_call.1} parent=1 // pred_check_branch
      %212 = sbr.rel (0) target = $region33
    $region32: #{tpu_custom_call.1} parent=1 // pred_region
      %214 = vsyncadd [#allocation4], 0
      %s216 = sshll.u32 [#allocation7], 4
      %s217 = int_to_ptr.vmem [resolvable:$true] %s216
      %s218 = sshll.u32 %s3, 4
      %s219 = int_to_ptr.hbm [resolvable:$true] %s218
      %221 = dma.vmem_to_hbm [thread:$0]  %s217, 128, %s219, [#allocation4]
    $region33: #{tpu_custom_call.1} parent=1 // pred_fallthru
      _
    // Predicated region
    $region34: #{tpu_custom_call.1} parent=1 // pred_check
      _
    $region35: #{tpu_custom_call.1} parent=1 // pred_check_branch
      %223 = sbr.rel (0) target = $region37
    $region36: #{tpu_custom_call.1} parent=1 // pred_region
      %225 = dma.done [#allocation4], 128
    $region37: #{tpu_custom_call.1} parent=1 // pred_fallthru
      _
    %226 = vsyncpa [#allocation3], 1
    %227 = vsyncpa [#allocation6], 1
    %228 = vsyncpa [#allocation4], 1

</llo_original>
